<compile_context>
chip_gen: v7x
topology: tpu7x:2x2x1
jax: 0.10.0
libtpu: 0.0.40
codegen_flags: <defaults>
</compile_context>

<pallas_src>
from dataclasses import dataclass
from typing import Dict

import jax
import jax.numpy as jnp
from jax import lax
from jax.experimental import pallas as pl
from jax.experimental.pallas import tpu as pltpu


_LANE_COLS = 512        # lane-dense width (multiple of 128 -> unmasked vst)
_MAX_TILE_ROWS = 2048   # (2048, 512) u32 block = 4 MiB; x2 (in+out) x2 (dbl buf) = 16 MiB


# ----------------------------------------------------------------------------
# Pallas kernel: identity copy of one lane-dense tile.
# ----------------------------------------------------------------------------
def _copy_kernel(x_ref, o_ref):
    # StaticModelBuilder.forward() returns the stored data unchanged; this
    # kernel is its one-time device-staging equivalent.
    o_ref[...] = x_ref[...]


def _packed_identity(packed: jax.Array, tile_rows: int) -> jax.Array:
    """One-shot identity passthrough of the packed (rows, 512) u32 slab."""
    rows, cols = packed.shape
    assert cols == _LANE_COLS and rows % tile_rows == 0
    grid = (rows // tile_rows,)
    return pl.pallas_call(
        _copy_kernel,
        out_shape=jax.ShapeDtypeStruct((rows, cols), packed.dtype),
        grid_spec=pltpu.PrefetchScalarGridSpec(
            num_scalar_prefetch=0,
            grid=grid,
            in_specs=[pl.BlockSpec((tile_rows, cols), lambda i: (i, 0))],
            out_specs=pl.BlockSpec((tile_rows, cols), lambda i: (i, 0)),
        ),
        compiler_params=pltpu.CompilerParams(
            # >=2 grid steps whenever possible so v7x's 2 TCs both stream.
            dimension_semantics=("parallel",),
            # 4 MiB blocks, <=16 MiB scoped: safe on v5e/v6e (128 MiB VMEM)
            # and v7x (64 MiB VMEM); explicit because v5e default is 16 MiB.
            vmem_limit_bytes=32 * 1024 * 1024,
        ),
    )(packed)


# ----------------------------------------------------------------------------
# Pack / unpack helpers (32-bit bit container; layout plumbing outside kernel)
# ----------------------------------------------------------------------------
def _to_bits_u32(a: jax.Array) -> jax.Array:
    if a.dtype == jnp.uint32:
        return a
    if a.dtype.itemsize == 4:
        return lax.bitcast_convert_type(a, jnp.uint32)
    # TODO(synk): sub-32-bit dtypes (bf16/int8) would need pair-packing; the
    # SMPL-X model data handled here is all 32-bit.
    raise NotImplementedError(f"unsupported dtype for packing: {a.dtype}")


def _from_bits_u32(bits: jax.Array, dtype) -> jax.Array:
    if dtype == jnp.uint32:
        return bits
    return lax.bitcast_convert_type(bits, dtype)


def _pack_model_arrays(arrays: Dict[str, jax.Array]):
    """Flatten+bitcast+concat all tensors into one lane-dense uint32 slab."""
    flats, metas, off = [], [], 0
    for name, a in arrays.items():
        n = int(a.size)
        flats.append(_to_bits_u32(a).reshape(-1))
        metas.append((name, off, n, tuple(a.shape), a.dtype))
        off += n

    rows = -(-off // _LANE_COLS)          # cdiv
    rows = ((rows + 7) // 8) * 8          # sublane (8) alignment

    if rows < 16:
        # Too small to split across cores; single full-slab block, grid=(1,).
        tile_rows = rows
    else:
        # ~Half the slab per tile (sublane-aligned), capped at _MAX_TILE_ROWS,
        # so the grid has >=2 steps and both v7x TensorCores participate.
        half = (((rows + 1) // 2) + 7) // 8 * 8
        tile_rows = min(_MAX_TILE_ROWS, half)
        rows = ((rows + tile_rows - 1) // tile_rows) * tile_rows  # exact grid

    pad = rows * _LANE_COLS - off
    if pad:
        flats.append(jnp.zeros((pad,), jnp.uint32))
    packed = jnp.concatenate(flats).reshape(rows, _LANE_COLS)
    return packed, tuple(metas), tile_rows


def _unpack_model_arrays(packed: jax.Array, metas) -> Dict[str, jax.Array]:
    flat = packed.reshape(-1)
    out = {}
    for name, off, n, shape, dtype in metas:
        seg = lax.slice_in_dim(flat, off, off + n)   # static slice
        out[name] = _from_bits_u32(seg, dtype).reshape(shape)
    return out


# ----------------------------------------------------------------------------
# ModelData + StaticModelBuilder (JAX/Pallas version)
# ----------------------------------------------------------------------------
@dataclass
class ModelData:
    """Minimal SMPL-X-style model data bundle (synthetic, deterministic)."""
    vertex_positions: jax.Array   # (V, 3)      f32
    shape_dirs: jax.Array         # (V, 3, NB)  f32
    joint_regressor: jax.Array    # (J, V)      f32
    lbs_weights: jax.Array        # (V, J)      f32
    kintree_parents: jax.Array    # (J,)        i32

    def as_dict(self) -> Dict[str, jax.Array]:
        return {
            "vertex_positions": self.vertex_positions,
            "shape_dirs": self.shape_dirs,
            "joint_regressor": self.joint_regressor,
            "lbs_weights": self.lbs_weights,
            "kintree_parents": self.kintree_parents,
        }


class StaticModelBuilder:
    """JAX/Pallas equivalent of the PyTorch StaticModelBuilder module."""

    def __init__(self, model_data: ModelData):
        # Pack once, run the identity-copy kernel ONCE to stage the slab on
        # device, unpack once, cache.  forward() is then O(1): it returns the
        # cached ModelData with zero HBM traffic (matching the PyTorch
        # `return self.model_data`).
        packed, metas, tile_rows = _pack_model_arrays(model_data.as_dict())
        staged = _packed_identity(packed, tile_rows)
        jax.block_until_ready(staged)
        self.model_data = ModelData(**_unpack_model_arrays(staged, metas))

    def get_model_data(self) -> ModelData:
        return self.model_data

    # TODO(synk): torch `device` property / `.to()` device movement has no
    # Pallas equivalent; device placement is handled by JAX outside the kernel.

    def forward(self) -> ModelData:
        return self.model_data

    __call__ = forward


# ----------------------------------------------------------------------------
# Demo / self-test
# ----------------------------------------------------------------------------
if __name__ == "__main__":
    key = jax.random.PRNGKey(0)
    k0, k1, k2, k3 = jax.random.split(key, 4)

    V, J, NB = 64, 8, 16  # small synthetic SMPL-X-like sizes

    model_data = ModelData(
        vertex_positions=jax.random.normal(k0, (V, 3), dtype=jnp.float32),
        shape_dirs=jax.random.normal(k1, (V, 3, NB), dtype=jnp.float32),
        joint_regressor=jax.random.normal(k2, (J, V), dtype=jnp.float32),
        lbs_weights=jax.nn.softmax(
            jax.random.normal(k3, (V, J), dtype=jnp.float32), axis=-1),
        kintree_parents=jnp.arange(J, dtype=jnp.int32) - 1,
    )

    # Construction runs the Pallas staging kernel once (grid has 2 steps for
    # this slab, so both v7x TensorCores would participate).
    builder = StaticModelBuilder(model_data)

    # forward() is now zero-cost: it returns the cached ModelData directly.
    out = builder()
    out = builder()

    # Block on results and verify exact (bit-for-bit) identity semantics.
    for name, arr in out.as_dict().items():
        jax.block_until_ready(arr)
        ref = model_data.as_dict()[name]
        assert arr.shape == ref.shape, (name, arr.shape, ref.shape)
        assert arr.dtype == ref.dtype, (name, arr.dtype, ref.dtype)
        assert bool(jnp.all(arr == ref)), f"mismatch in {name}"

    print("KERNEL_OK")
</pallas_src>

<mosaic_0001>
module attributes {stable_mosaic.version = 11 : i64} {
  func.func @_copy_kernel(%arg0: i32, %arg1: memref<8x512xi32, #tpu.memory_space<vmem>>, %arg2: memref<8x512xi32, #tpu.memory_space<vmem>>) attributes {dimension_semantics = [#tpu.dimension_semantics<parallel>], iteration_bounds = array<i64: 2>, scalar_prefetch = 0 : i64, scratch_operands = 0 : i64, tpu.core_type = #tpu.core_type<tc>, window_params = [{transform_indices = @transform_0, window_bounds = array<i64: 8, 512>}, {transform_indices = @transform_1, window_bounds = array<i64: 8, 512>}]} {
    %c0 = arith.constant 0 : index
    %c0_0 = arith.constant 0 : index
    %0 = vector.load %arg1[%c0, %c0_0] : memref<8x512xi32, #tpu.memory_space<vmem>>, vector<8x512xi32>
    %c0_1 = arith.constant 0 : index
    %c0_2 = arith.constant 0 : index
    %1 = vector.load %arg2[%c0_1, %c0_2] : memref<8x512xi32, #tpu.memory_space<vmem>>, vector<8x512xi32>
    tpu.vector_store %arg2[%c0_1, %c0_2], %0 {strides = array<i32>} : memref<8x512xi32, #tpu.memory_space<vmem>>, vector<8x512xi32>,
    return
  }
  func.func @transform_0(%arg0: i32) -> (i32, i32) {
    %c0_i32 = arith.constant 0 : i32
    %c0_i32_0 = arith.constant 0 : i32
    return %arg0, %c0_i32 : i32, i32
  }
  func.func @transform_1(%arg0: i32) -> (i32, i32) {
    %c0_i32 = arith.constant 0 : i32
    %c0_i32_0 = arith.constant 0 : i32
    return %arg0, %c0_i32 : i32, i32
  }
}

</mosaic_0001>

<llo_original>
// kernel: tpu_custom_call.1
$region0: #{tpu_custom_call.1}
  #allocation0 [shape = 'u32[]', space=smem, size = 0x4, offset = 0x4, fixed_abs, tag = 'smem constant byte address 0x4 - core index']
  #allocation1 [shape = 'u32[144,128]{1,0:T(1,128)}', space=vmem, size = 0x12000, scoped, tag = 'internal scratch']
  %s0 = inlined_call_operand.hbm [shape: u32[16,512], index: 0, kind: input, shape index: {}]
  %s1 = inlined_call_operand.hbm [shape: u32[16,512], index: 1, kind: output, shape index: {}]
  %s2 = sld [smem:[#allocation0]]
  $region41: #{tpu_custom_call.1} parent=0
    _
  %s4 = ssub.s32 1, %s2
  %s5 = scalar_select 0, %s4, %s2
  $region1: #{tpu_custom_call.1} parent=0
    #allocation2 [shape = 'u8[32768]{0}', space=vmem, size = 0x8000, scoped, tag = 'input window, operand 0']
    #allocation3 [shape = 's32[2]{0}', space=sflag, size = 0x8, scoped, tag = 'scoped memory for tpu_custom_call.1']
    #allocation4 [shape = 's32[2]{0}', space=sflag, size = 0x8, scoped, tag = 'scoped memory for tpu_custom_call.1']
    #allocation5 [shape = 'u8[32768]{0}', space=vmem, size = 0x8000, scoped, tag = 'output window, operand 0']
    %6 = vsyncpa [#allocation3], 0
    %s7 = scalar_lea.sflag [#allocation3], 1
    %8 = vsyncpa %s7, 0
    %9 = vsyncpa [#allocation4], 0
    %s10 = scalar_lea.sflag [#allocation4], 1
    %11 = vsyncpa %s10, 0
    loop: start=0, step=1, limit=4
    $region2: #{tpu_custom_call.1} parent=1 // loop_pre_header
      _
    $region3: #{tpu_custom_call.1} parent=1 // loop_header
      %s13 = sphi 0, %s17
      %p14 = scmp.ge.s32.totalorder %s13, 4
      %s23 = sphi 0, %s25
      %s26 = sphi 0, %s23
      %s27 = sphi 0, %s26
      %s43 = sphi 0, %s27
      %s49 = sphi 0, %s51
      %s52 = sphi 0, %s49
      %s53 = sphi 0, %s52
      %s69 = sphi 0, %s53
    $region4: #{tpu_custom_call.1} parent=1 // loop_header_branch
      %16 = sbr.rel (%p14) target = $region8
    $region5: #{tpu_custom_call.1} parent=1 // loop_body
      %s18 = ssub.s32 %s13, 1
      %s19 = ssub.s32 %s13, 2
      %s20 = sadd.s32 %s13, 1
      %s21 = ssub.s32 %s13, %s20
      %p22 = scmp.eq.s32.totalorder %s21, 0
      %s24 = sadd.s32 %s23, 1
      %s25 = scalar_select %p22, %s23, %s24
      %p28 = pneg %p22
      %p29 = scmp.eq.s32.totalorder %s13, 1
      %p30 = por %p28, %p29
      %p31 = scmp.ne.s32.totalorder %s23, %s26
      %p32 = scmp.eq.s32.totalorder %s13, 0
      %p33 = por %p31, %p32
      %p34 = scmp.ne.s32.totalorder %s23, %s26
      %p35 = scmp.eq.s32.totalorder %s18, 1
      %p36 = por %p34, %p35
      %p37 = scmp.ne.s32.totalorder %s26, %s27
      %p38 = scmp.eq.s32.totalorder %s18, 0
      %p39 = por %p37, %p38
      %p40 = scmp.ne.s32.totalorder %s26, %s27
      %p41 = scmp.eq.s32.totalorder %s19, 1
      %p42 = por %p40, %p41
      %p44 = scmp.ne.s32.totalorder %s27, %s43
      %p45 = scmp.eq.s32.totalorder %s19, 0
      %p46 = por %p44, %p45
      %s47 = ssub.s32 %s13, %s20
      %p48 = scmp.eq.s32.totalorder %s47, 0
      %s50 = sadd.s32 %s49, 1
      %s51 = scalar_select %p48, %s49, %s50
      %p54 = pneg %p48
      %p55 = scmp.eq.s32.totalorder %s13, 1
      %p56 = por %p54, %p55
      %p57 = scmp.ne.s32.totalorder %s49, %s52
      %p58 = scmp.eq.s32.totalorder %s13, 0
      %p59 = por %p57, %p58
      %p60 = scmp.ne.s32.totalorder %s49, %s52
      %p61 = scmp.eq.s32.totalorder %s18, 1
      %p62 = por %p60, %p61
      %p63 = scmp.ne.s32.totalorder %s52, %s53
      %p64 = scmp.eq.s32.totalorder %s18, 0
      %p65 = por %p63, %p64
      %p66 = scmp.ne.s32.totalorder %s52, %s53
      %p67 = scmp.eq.s32.totalorder %s19, 1
      %p68 = por %p66, %p67
      %p70 = scmp.ne.s32.totalorder %s53, %s69
      %p71 = scmp.eq.s32.totalorder %s19, 0
      %p72 = por %p70, %p71
      %p73 = scmp.le.s32.totalorder 1, %s13
      %p74 = scmp.lt.s32.totalorder %s13, 3
      %p75 = pnand %p73, %p74
      %p76 = pneg %p75
      // Predicated region
      $region9: #{tpu_custom_call.1} parent=5 // pred_check
        _
      $region10: #{tpu_custom_call.1} parent=5 // pred_check_branch
        %78 = sbr.rel (%p75) target = $region12
      $region11: #{tpu_custom_call.1} parent=5 // pred_region
        %s79 = ssub.s32 %s13, 1
      $region12: #{tpu_custom_call.1} parent=5 // pred_fallthru
        _
      %p80 = scmp.lt.s32.totalorder %s13, 2
      // Predicated region
      $region13: #{tpu_custom_call.1} parent=5 // pred_check
        %p81 = pneg %p80
      $region14: #{tpu_custom_call.1} parent=5 // pred_check_branch
        %83 = sbr.rel (%p81) target = $region16
      $region15: #{tpu_custom_call.1} parent=5 // pred_region
        // Predicated region
        $region17: #{tpu_custom_call.1} parent=15 // pred_check
          %p84 = pneg %p33
        $region18: #{tpu_custom_call.1} parent=15 // pred_check_branch
          %86 = sbr.rel (%p84) target = $region20
        $region19: #{tpu_custom_call.1} parent=15 // pred_region
          %s87 = sand.u32 %s23, 1
          %s88 = scalar_lea.sflag [#allocation3], %s87
          %s89 = sand.u32 %s23, 1
          %s90 = smul.addr %s89, 32
          %s91 = scalar_lea.vmem [#allocation2], %s90
          %s93 = ssub.s32 512, 512
          %94 = vsyncadd %s88, %s93
          %s95 = smul.addr %s13, 4
          %s96 = smul.addr %s95, 128
          %s97 = scalar_lea.hbm %s0, %s96
          %s99 = sshll.u32 %s91, 4
          %s100 = int_to_ptr.vmem [resolvable:$true] %s99
          %102 = dma.hbm_to_vmem [thread:$0]  %s97, 512, %s100, %s88
        $region20: #{tpu_custom_call.1} parent=15 // pred_fallthru
          _
      $region16: #{tpu_custom_call.1} parent=5 // pred_fallthru
        _
      %p103 = scmp.le.s32.totalorder 1, %s13
      %p104 = scmp.lt.s32.totalorder %s13, 3
      %p105 = pnand %p103, %p104
      %p106 = pneg %p105
      // Predicated region
      $region21: #{tpu_custom_call.1} parent=5 // pred_check
        _
      $region22: #{tpu_custom_call.1} parent=5 // pred_check_branch
        %108 = sbr.rel (%p105) target = $region24
      $region23: #{tpu_custom_call.1} parent=5 // pred_region
        %s109 = ssub.s32 %s13, 1
        %s110 = sand.u32 %s26, 1
        %s111 = scalar_lea.sflag [#allocation3], %s110
        %s112 = sand.u32 %s26, 1
        %s113 = smul.addr %s112, 32
        %s114 = scalar_lea.vmem [#allocation2], %s113
        // Predicated region
        $region25: #{tpu_custom_call.1} parent=23 // pred_check
          %p115 = pneg %p39
        $region26: #{tpu_custom_call.1} parent=23 // pred_check_branch
          %117 = sbr.rel (%p115) target = $region28
        $region27: #{tpu_custom_call.1} parent=23 // pred_region
          %118 = dma.done %s111, 512
        $region28: #{tpu_custom_call.1} parent=23 // pred_fallthru
          _
        %s119 = sand.u32 %s26, 1
        %s120 = scalar_lea.sflag [#allocation3], %s119
        %s121 = sand.u32 %s26, 1
        %s122 = smul.addr %s121, 32
        %s123 = scalar_lea.vmem [#allocation2], %s122
        %p124 = pneg %p39
        %p125 = pneg %p36
        %p126 = pneg %p65
        %p127 = pneg %p62
        %s128 = sand.u32 %s52, 1
        %s129 = scalar_lea.sflag [#allocation4], %s128
        %s130 = sand.u32 %s52, 1
        %s131 = smul.addr %s130, 32
        %s132 = scalar_lea.vmem [#allocation5], %s131
        %v133 = vld [vmem:[%s114] sm:$0xff]
        %v134 = vld [vmem:[%s114 + $0x8] sm:$0xff]
        %v135 = vld [vmem:[%s114 + $0x10] sm:$0xff]
        %v136 = vld [vmem:[%s114 + $0x18] sm:$0xff]
        %137 = vst [vmem:[%s132] sm:$0xff] %v133
        %138 = vst [vmem:[%s132 + $0x8] sm:$0xff] %v134
        %139 = vst [vmem:[%s132 + $0x10] sm:$0xff] %v135
        %140 = vst [vmem:[%s132 + $0x18] sm:$0xff] %v136
        %s141 = sand.u32 %s52, 1
        %s142 = scalar_lea.sflag [#allocation4], %s141
        %s143 = sand.u32 %s52, 1
        %s144 = smul.addr %s143, 32
        %s145 = scalar_lea.vmem [#allocation5], %s144
        // Predicated region
        $region29: #{tpu_custom_call.1} parent=23 // pred_check
          %p146 = pneg %p62
        $region30: #{tpu_custom_call.1} parent=23 // pred_check_branch
          %148 = sbr.rel (%p146) target = $region32
        $region31: #{tpu_custom_call.1} parent=23 // pred_region
          %s150 = ssub.s32 512, 512
          %151 = vsyncadd %s142, %s150
          %s152 = smul.addr %s18, 4
          %s153 = smul.addr %s152, 128
          %s154 = scalar_lea.hbm %s1, %s153
          %s156 = sshll.u32 %s145, 4
          %s157 = int_to_ptr.vmem [resolvable:$true] %s156
          %159 = dma.vmem_to_hbm [thread:$0]  %s157, 512, %s154, %s142
        $region32: #{tpu_custom_call.1} parent=23 // pred_fallthru
          _
      $region24: #{tpu_custom_call.1} parent=5 // pred_fallthru
        _
      %p160 = scmp.le.s32.totalorder 2, %s13
      // Predicated region
      $region33: #{tpu_custom_call.1} parent=5 // pred_check
        %p161 = pneg %p160
      $region34: #{tpu_custom_call.1} parent=5 // pred_check_branch
        %163 = sbr.rel (%p161) target = $region36
      $region35: #{tpu_custom_call.1} parent=5 // pred_region
        %s164 = ssub.s32 %s13, 2
        // Predicated region
        $region37: #{tpu_custom_call.1} parent=35 // pred_check
          %p165 = pneg %p68
        $region38: #{tpu_custom_call.1} parent=35 // pred_check_branch
          %167 = sbr.rel (%p165) target = $region40
        $region39: #{tpu_custom_call.1} parent=35 // pred_region
          %s168 = sand.u32 %s53, 1
          %s169 = scalar_lea.sflag [#allocation4], %s168
          %s170 = sand.u32 %s53, 1
          %s171 = smul.addr %s170, 32
          %s172 = scalar_lea.vmem [#allocation5], %s171
          %173 = dma.done %s169, 512
        $region40: #{tpu_custom_call.1} parent=35 // pred_fallthru
          _
      $region36: #{tpu_custom_call.1} parent=5 // pred_fallthru
        _
    $region6: #{tpu_custom_call.1} parent=1 // loop_footer
      %s17 = sadd.s32 1, %s13
    $region7: #{tpu_custom_call.1} parent=1 // loop_footer_branch
      %12 = sbr.rel target = $region3
    $region8: #{tpu_custom_call.1} parent=1 // loop_exit
      _
    %174 = vsyncpa [#allocation3], 1
    %s175 = scalar_lea.sflag [#allocation3], 1
    %176 = vsyncpa %s175, 1
    %177 = vsyncpa [#allocation4], 1
    %s178 = scalar_lea.sflag [#allocation4], 1
    %179 = vsyncpa %s178, 1

</llo_original>
